<compile_context>
chip_gen: v6e
topology: v6e:2x2x1
jax: 0.10.0
libtpu: 0.0.40
codegen_flags: <defaults>
</compile_context>

<pallas_src>
import functools

import jax
import jax.numpy as jnp
from jax.experimental import pallas as pl
from jax.experimental.pallas import tpu as pltpu


def _round_up(x, m):
    return ((x + m - 1) // m) * m


def _log_softmax(x):
    m = jnp.max(x, axis=-1, keepdims=True)
    s = x - m
    lse = jnp.log(jnp.sum(jnp.exp(s), axis=-1, keepdims=True))
    return s - lse


# ---------------- kernel: base cross-entropy only ('none') ----------------
def ce_only_kernel(cls_ref, labels_ref, loss_ref, *, batch):
    outputs = cls_ref[...].astype(jnp.float32)        # (Bp, N)
    labels = labels_ref[...]                          # (Bp, 1) int32, -1 on padded rows
    Bp, N = outputs.shape
    cols = jax.lax.broadcasted_iota(jnp.int32, (Bp, N), 1)
    one_hot = (cols == labels).astype(jnp.float32)    # padded rows -> all-zero
    logp = _log_softmax(outputs)
    loss_ref[0, 0] = -jnp.sum(one_hot * logp) / batch


# ------------- kernel: CE + distillation ('soft' / 'hard') ----------------
def distill_kernel(x_ref, w_ref, b_ref, cls_ref, kd_ref, labels_ref,
                   loss_ref, acc_ref, *, alpha, tau, dist_type, batch, tb):
    b = pl.program_id(0)          # batch-tile index (outer)
    k = pl.program_id(1)          # K-tile index (inner, reduction)
    nk = pl.num_programs(1)

    @pl.when((b == 0) & (k == 0))
    def _():
        loss_ref[0, 0] = 0.0

    # Fold the teacher bias into the accumulator at the first K step.
    @pl.when(k == 0)
    def _():
        acc_ref[...] = jnp.broadcast_to(b_ref[...].astype(jnp.float32),
                                        acc_ref.shape)

    # Teacher partial matmul on the MXU: bf16 operands, f32 accumulation.
    acc_ref[...] += jnp.dot(x_ref[...], w_ref[...],
                            preferred_element_type=jnp.float32)

    @pl.when(k == nk - 1)
    def _():
        teacher = acc_ref[...]                                     # (TB, N)
        outputs = cls_ref[...].astype(jnp.float32)
        outputs_kd = kd_ref[...].astype(jnp.float32)
        labels = labels_ref[...]                                   # (TB, 1)

        TB, N = outputs.shape
        cols = jax.lax.broadcasted_iota(jnp.int32, (TB, N), 1)
        rows = b * tb + jax.lax.broadcasted_iota(jnp.int32, (TB, 1), 0)
        row_mask = (rows < batch).astype(jnp.float32)              # (TB, 1)

        # base criterion: F.cross_entropy(outputs, labels), mean over batch.
        one_hot = (cols == labels).astype(jnp.float32)             # padded rows zero
        logp = _log_softmax(outputs)
        base_part = -jnp.sum(one_hot * logp) / batch

        if dist_type == 'soft':
            T = tau
            ls_s = _log_softmax(outputs_kd / T)
            ls_t = _log_softmax(teacher / T)
            # F.kl_div(ls_s, ls_t, reduction='sum', log_target=True) * T^2 / numel
            kl_rows = jnp.sum(jnp.exp(ls_t) * (ls_t - ls_s), axis=-1, keepdims=True)
            kl = jnp.sum(kl_rows * row_mask)
            dist_part = kl * (T * T) / (batch * N)
        else:  # 'hard'
            # argmax(teacher, axis=1) with first-match tie-break (max + min index)
            t_max = jnp.max(teacher, axis=-1, keepdims=True)
            idx_or_big = jnp.where(teacher == t_max, cols, N)
            t_label = jnp.min(idx_or_big, axis=-1, keepdims=True)
            one_hot_t = (cols == t_label).astype(jnp.float32) * row_mask
            logp_kd = _log_softmax(outputs_kd)
            dist_part = -jnp.sum(one_hot_t * logp_kd) / batch

        loss_ref[0, 0] += base_part * (1.0 - alpha) + dist_part * alpha


def distillation_loss(inputs, outputs, labels, teacher_w, teacher_b,
                      distillation_type='soft', alpha=0.5, tau=2.0,
                      block_k=512, block_b=128):
    """JAX/Pallas equivalent of DistillationLoss.forward."""
    if distillation_type not in ('none', 'soft', 'hard'):
        raise ValueError(distillation_type)
    if isinstance(outputs, (tuple, list)):
        outputs_cls, outputs_kd = outputs
    else:
        outputs_cls, outputs_kd = outputs, None
    if distillation_type != 'none' and outputs_kd is None:
        raise ValueError('When knowledge distillation is enabled, the model is '
                         'expected to return a Tuple[Tensor, Tensor]')

    B, N = outputs_cls.shape

    smem = pltpu.MemorySpace.SMEM
    vmem = pltpu.MemorySpace.VMEM

    if distillation_type == 'none':
        # No teacher forward: never DMA inputs / teacher weights / dist logits.
        B_pad = max(8, _round_up(B, 8))

        def pad_rows(a, value=0):
            return jnp.pad(a, ((0, B_pad - B), (0, 0)), constant_values=value)

        cls_pad = pad_rows(outputs_cls.astype(jnp.float32))
        labels_pad = pad_rows(labels.reshape(B, 1).astype(jnp.int32), value=-1)
        loss = pl.pallas_call(
            functools.partial(ce_only_kernel, batch=B),
            out_shape=jax.ShapeDtypeStruct((1, 1), jnp.float32),
            in_specs=[pl.BlockSpec(memory_space=vmem),
                      pl.BlockSpec(memory_space=vmem)],
            out_specs=pl.BlockSpec(memory_space=smem),
        )(cls_pad, labels_pad)
        return loss[0, 0]

    # ---- batch tiling -------------------------------------------------------
    TB = min(_round_up(B, 8), max(8, _round_up(block_b, 8)))
    B_pad = _round_up(B, TB)
    nb = B_pad // TB

    def pad_rows(a, value=0):
        return jnp.pad(a, ((0, B_pad - B), (0, 0)), constant_values=value)

    cls_pad = pad_rows(outputs_cls.astype(jnp.float32))
    kd_pad = pad_rows(outputs_kd.astype(jnp.float32))
    labels_pad = pad_rows(labels.reshape(B, 1).astype(jnp.int32), value=-1)

    # ---- K tiling -----------------------------------------------------------
    D = 1
    for s in inputs.shape[1:]:
        D *= s
    x_flat = inputs.reshape(B, D).astype(jnp.bfloat16)   # bf16 MXU operand
    w_bf16 = teacher_w.astype(jnp.bfloat16)
    b2d = teacher_b.reshape(1, N).astype(jnp.float32)

    TK = min(_round_up(int(block_k), 128), _round_up(D, 128))
    D_pad = _round_up(D, TK)
    nk = D_pad // TK

    x_pad = jnp.pad(x_flat, ((0, B_pad - B), (0, D_pad - D)))
    w_pad = jnp.pad(w_bf16, ((0, D_pad - D), (0, 0)))

    # VMEM budget: double-buffered bf16 K tiles + per-batch-tile f32 blocks.
    stream_bytes = (2 * 2 * (TB * TK + TK * N)           # x / W_t tiles (bf16)
                    + 2 * 4 * (2 * TB * N + TB + N))     # cls / kd / labels / bias
    resident_bytes = 4 * TB * N                          # f32 accumulator scratch
    vmem_limit = int(min(128 * 1024 * 1024,
                         max(16 * 1024 * 1024,
                             2 * (stream_bytes + resident_bytes) + (1 << 20))))

    kernel = functools.partial(distill_kernel, alpha=float(alpha),
                               tau=float(tau), dist_type=distillation_type,
                               batch=B, tb=TB)

    # TODO(synk): for nb >> 1, W_t is re-streamed once per batch tile; if the
    # teacher weight ever dominates traffic, swap loop order or enlarge TB.
    grid_spec = pltpu.PrefetchScalarGridSpec(
        num_scalar_prefetch=0,
        grid=(nb, nk),
        in_specs=[
            pl.BlockSpec((TB, TK), lambda b, k: (b, k)),   # x     : streamed B x K
            pl.BlockSpec((TK, N), lambda b, k: (k, 0)),    # W_t   : streamed over K
            pl.BlockSpec((1, N), lambda b, k: (0, 0)),     # b_t   : resident
            pl.BlockSpec((TB, N), lambda b, k: (b, 0)),    # student class logits
            pl.BlockSpec((TB, N), lambda b, k: (b, 0)),    # student dist logits
            pl.BlockSpec((TB, 1), lambda b, k: (b, 0)),    # labels
        ],
        out_specs=pl.BlockSpec((1, 1), lambda b, k: (0, 0), memory_space=smem),
        scratch_shapes=[pltpu.VMEM((TB, N), jnp.float32)],
    )

    cost = pl.CostEstimate(
        flops=2 * B_pad * D_pad * N,
        transcendentals=3 * B_pad * N,
        bytes_accessed=(x_pad.size * 2 + w_pad.size * 2 * nb + b2d.size * 4 +
                        cls_pad.size * 4 + kd_pad.size * 4 +
                        labels_pad.size * 4 + 4),
    )

    loss = pl.pallas_call(
        kernel,
        out_shape=jax.ShapeDtypeStruct((1, 1), jnp.float32),
        grid_spec=grid_spec,
        compiler_params=pltpu.CompilerParams(
            dimension_semantics=("arbitrary", "arbitrary"),
            vmem_limit_bytes=vmem_limit),
        cost_estimate=cost,
    )(x_pad, w_pad, b2d, cls_pad, kd_pad, labels_pad)
    return loss[0, 0]


if __name__ == "__main__":
    B, C, H, W, NUM_CLASSES = 2, 4, 16, 16, 32
    ALPHA, TAU = 0.5, 2.0
    D = C * H * W

    key = jax.random.PRNGKey(0)
    k1, k2, k3, k4, k5, k6 = jax.random.split(key, 6)
    inputs = jax.random.normal(k1, (B, C, H, W), jnp.float32)
    outputs_cls = jax.random.normal(k2, (B, NUM_CLASSES), jnp.float32)
    outputs_kd = jax.random.normal(k3, (B, NUM_CLASSES), jnp.float32)
    labels = jax.random.randint(k4, (B,), 0, NUM_CLASSES)
    # deterministic synthetic teacher parameters (linear teacher)
    teacher_w = jax.random.normal(k5, (D, NUM_CLASSES), jnp.float32) * 0.02
    teacher_b = jax.random.normal(k6, (1, NUM_CLASSES), jnp.float32) * 0.02

    loss_soft = distillation_loss(inputs, (outputs_cls, outputs_kd), labels,
                                  teacher_w, teacher_b, 'soft', ALPHA, TAU)
    loss_hard = distillation_loss(inputs, (outputs_cls, outputs_kd), labels,
                                  teacher_w, teacher_b, 'hard', ALPHA, TAU)
    loss_none = distillation_loss(inputs, (outputs_cls, outputs_kd), labels,
                                  teacher_w, teacher_b, 'none', ALPHA, TAU)
    jax.block_until_ready((loss_soft, loss_hard, loss_none))

    # ---- pure-JAX reference (same bf16 teacher-matmul operands as kernel) ----
    def ref(dist_type):
        x_flat = inputs.reshape(B, -1)
        t = jnp.dot(x_flat.astype(jnp.bfloat16), teacher_w.astype(jnp.bfloat16),
                    preferred_element_type=jnp.float32) + teacher_b
        logp = jax.nn.log_softmax(outputs_cls, axis=1)
        base = -jnp.mean(logp[jnp.arange(B), labels])
        if dist_type == 'none':
            return base
        if dist_type == 'soft':
            ls_s = jax.nn.log_softmax(outputs_kd / TAU, axis=1)
            ls_t = jax.nn.log_softmax(t / TAU, axis=1)
            d = jnp.sum(jnp.exp(ls_t) * (ls_t - ls_s)) * (TAU * TAU) / (B * NUM_CLASSES)
        else:
            tl = jnp.argmax(t, axis=1)
            lpkd = jax.nn.log_softmax(outputs_kd, axis=1)
            d = -jnp.mean(lpkd[jnp.arange(B), tl])
        return base * (1 - ALPHA) + d * ALPHA

    assert jnp.allclose(loss_soft, ref('soft'), atol=1e-4, rtol=1e-4)
    assert jnp.allclose(loss_hard, ref('hard'), atol=1e-4, rtol=1e-4)
    assert jnp.allclose(loss_none, ref('none'), atol=1e-4, rtol=1e-4)
    print("KERNEL_OK")
</pallas_src>

<mosaic_0001>
module attributes {stable_mosaic.version = 11 : i64} {
  func.func @distill_kernel(%arg0: i32, %arg1: i32, %arg2: memref<8x512xbf16, #tpu.memory_space<vmem>>, %arg3: memref<512x32xbf16, #tpu.memory_space<vmem>>, %arg4: memref<1x32xf32, #tpu.memory_space<vmem>>, %arg5: memref<8x32xf32, #tpu.memory_space<vmem>>, %arg6: memref<8x32xf32, #tpu.memory_space<vmem>>, %arg7: memref<8x1xi32, #tpu.memory_space<vmem>>, %arg8: memref<1x1xf32, #tpu.memory_space<smem>>, %arg9: memref<8x32xf32, #tpu.memory_space<vmem>>) attributes {dimension_semantics = [#tpu.dimension_semantics<arbitrary>, #tpu.dimension_semantics<arbitrary>], iteration_bounds = array<i64: 1, 2>, scalar_prefetch = 0 : i64, scratch_operands = 1 : i64, tpu.core_type = #tpu.core_type<tc>, window_params = [{transform_indices = @transform_0, window_bounds = array<i64: 8, 512>}, {transform_indices = @transform_1, window_bounds = array<i64: 512, 32>}, {pipeline_mode = #tpu.pipeline_mode<synchronous>, transform_indices = @transform_2, window_bounds = array<i64: 1, 32>}, {transform_indices = @transform_3, window_bounds = array<i64: 8, 32>}, {transform_indices = @transform_4, window_bounds = array<i64: 8, 32>}, {transform_indices = @transform_5, window_bounds = array<i64: 8, 1>}, {transform_indices = @transform_6, window_bounds = array<i64: 1, 1>}]} {
    %c0_i32 = arith.constant 0 : i32
    %0 = arith.cmpi eq, %arg0, %c0_i32 : i32
    %c0_i32_0 = arith.constant 0 : i32
    %1 = arith.cmpi eq, %arg1, %c0_i32_0 : i32
    %2 = arith.andi %0, %1 : i1
    %3 = arith.extui %2 : i1 to i32
    %c0_i32_1 = arith.constant 0 : i32
    %4 = arith.cmpi ne, %3, %c0_i32_1 : i32
    scf.if %4 {
      %cst_12 = arith.constant 0.000000e+00 : f32
      %c0_13 = arith.constant 0 : index
      %c0_14 = arith.constant 0 : index
      %17 = memref.load %arg8[%c0_13, %c0_14] : memref<1x1xf32, #tpu.memory_space<smem>>
      memref.store %cst_12, %arg8[%c0_13, %c0_14] : memref<1x1xf32, #tpu.memory_space<smem>>
    } else {
    }
    %c0_i32_2 = arith.constant 0 : i32
    %5 = arith.cmpi eq, %arg1, %c0_i32_2 : i32
    %6 = arith.extui %5 : i1 to i32
    %c0_i32_3 = arith.constant 0 : i32
    %7 = arith.cmpi ne, %6, %c0_i32_3 : i32
    scf.if %7 {
      %c0_12 = arith.constant 0 : index
      %c0_13 = arith.constant 0 : index
      %17 = vector.load %arg4[%c0_12, %c0_13] : memref<1x32xf32, #tpu.memory_space<vmem>>, vector<1x32xf32>
      %18 = vector.shape_cast %17 : vector<1x32xf32> to vector<1x32xf32>
      %19 = vector.broadcast %18 : vector<1x32xf32> to vector<8x32xf32>
      %c0_14 = arith.constant 0 : index
      %c0_15 = arith.constant 0 : index
      %20 = vector.load %arg9[%c0_14, %c0_15] : memref<8x32xf32, #tpu.memory_space<vmem>>, vector<8x32xf32>
      tpu.vector_store %arg9[%c0_14, %c0_15], %19 {strides = array<i32>} : memref<8x32xf32, #tpu.memory_space<vmem>>, vector<8x32xf32>,
    } else {
    }
    %c0 = arith.constant 0 : index
    %c0_4 = arith.constant 0 : index
    %8 = vector.load %arg9[%c0, %c0_4] : memref<8x32xf32, #tpu.memory_space<vmem>>, vector<8x32xf32>
    %c0_5 = arith.constant 0 : index
    %c0_6 = arith.constant 0 : index
    %9 = vector.load %arg2[%c0_5, %c0_6] : memref<8x512xbf16, #tpu.memory_space<vmem>>, vector<8x512xbf16>
    %c0_7 = arith.constant 0 : index
    %c0_8 = arith.constant 0 : index
    %10 = vector.load %arg3[%c0_7, %c0_8] : memref<512x32xbf16, #tpu.memory_space<vmem>>, vector<512x32xbf16>
    %cst = arith.constant dense<0.000000e+00> : vector<8x32xf32>
    %11 = tpu.matmul %9, %10, %cst {dimension_numbers = #tpu.dot_dimension_numbers<[1], [0], [0], [1], [0, 0, 1, 1], [], []>} : vector<8x512xbf16>, vector<512x32xbf16>, vector<8x32xf32> -> vector<8x32xf32>
    %12 = arith.addf %8, %11 : vector<8x32xf32>
    %c0_9 = arith.constant 0 : index
    %c0_10 = arith.constant 0 : index
    %13 = vector.load %arg9[%c0_9, %c0_10] : memref<8x32xf32, #tpu.memory_space<vmem>>, vector<8x32xf32>
    tpu.vector_store %arg9[%c0_9, %c0_10], %12 {strides = array<i32>} : memref<8x32xf32, #tpu.memory_space<vmem>>, vector<8x32xf32>,
    %c1_i32 = arith.constant 1 : i32
    %14 = arith.cmpi eq, %arg1, %c1_i32 : i32
    %15 = arith.extui %14 : i1 to i32
    %c0_i32_11 = arith.constant 0 : i32
    %16 = arith.cmpi ne, %15, %c0_i32_11 : i32
    scf.if %16 {
      %c0_12 = arith.constant 0 : index
      %c0_13 = arith.constant 0 : index
      %17 = vector.load %arg9[%c0_12, %c0_13] : memref<8x32xf32, #tpu.memory_space<vmem>>, vector<8x32xf32>
      %c0_14 = arith.constant 0 : index
      %c0_15 = arith.constant 0 : index
      %18 = vector.load %arg5[%c0_14, %c0_15] : memref<8x32xf32, #tpu.memory_space<vmem>>, vector<8x32xf32>
      %c0_16 = arith.constant 0 : index
      %c0_17 = arith.constant 0 : index
      %19 = vector.load %arg6[%c0_16, %c0_17] : memref<8x32xf32, #tpu.memory_space<vmem>>, vector<8x32xf32>
      %c0_18 = arith.constant 0 : index
      %c0_19 = arith.constant 0 : index
      %20 = vector.load %arg7[%c0_18, %c0_19] : memref<8x1xi32, #tpu.memory_space<vmem>>, vector<8x1xi32>
      %21 = tpu.iota {dimensions = array<i32: 1>} : vector<8x32xi32>
      %c8_i32 = arith.constant 8 : i32
      %22 = arith.muli %arg0, %c8_i32 : i32
      %23 = tpu.iota {dimensions = array<i32: 0>} : vector<8x1xi32>
      %24 = vector.broadcast %22 : i32 to vector<8x1xi32>
      %25 = arith.addi %24, %23 : vector<8x1xi32>
      %c2_i32 = arith.constant 2 : i32
      %26 = vector.broadcast %c2_i32 : i32 to vector<8x1xi32>
      %27 = arith.cmpi slt, %25, %26 : vector<8x1xi32>
      %28 = arith.extui %27 : vector<8x1xi1> to vector<8x1xi32>
      %29 = arith.sitofp %28 : vector<8x1xi32> to vector<8x1xf32>
      %30 = vector.broadcast %20 : vector<8x1xi32> to vector<8x32xi32>
      %31 = arith.cmpi eq, %21, %30 : vector<8x32xi32>
      %32 = arith.extui %31 : vector<8x32xi1> to vector<8x32xi32>
      %33 = arith.sitofp %32 : vector<8x32xi32> to vector<8x32xf32>
      %cst_20 = arith.constant dense<0xFF800000> : vector<8xf32>
      %34 = vector.multi_reduction <maximumf>, %18, %cst_20 [1] : vector<8x32xf32> to vector<8xf32>
      %35 = vector.shape_cast %34 : vector<8xf32> to vector<8x1xf32>
      %36 = vector.broadcast %35 : vector<8x1xf32> to vector<8x32xf32>
      %37 = arith.subf %18, %36 : vector<8x32xf32>
      %38 = math.exp %37 : vector<8x32xf32>
      %cst_21 = arith.constant dense<0.000000e+00> : vector<8xf32>
      %39 = vector.multi_reduction <add>, %38, %cst_21 [1] : vector<8x32xf32> to vector<8xf32>
      %40 = vector.shape_cast %39 : vector<8xf32> to vector<8x1xf32>
      %41 = math.log %40 : vector<8x1xf32>
      %42 = vector.broadcast %41 : vector<8x1xf32> to vector<8x32xf32>
      %43 = arith.subf %37, %42 : vector<8x32xf32>
      %44 = arith.mulf %33, %43 : vector<8x32xf32>
      %45 = vector.shape_cast %44 : vector<8x32xf32> to vector<1x8x32xf32>
      %cst_22 = arith.constant dense<0.000000e+00> : vector<1xf32>
      %46 = vector.multi_reduction <add>, %45, %cst_22 [1, 2] : vector<1x8x32xf32> to vector<1xf32>
      %47 = vector.shape_cast %46 : vector<1xf32> to vector<1x1x1xf32>
      %48 = vector.extract %47[0, 0, 0] : f32 from vector<1x1x1xf32>
      %cst_23 = arith.constant 0.000000e+00 : f32
      %49 = arith.subf %cst_23, %48 : f32
      %cst_24 = arith.constant 2.000000e+00 : f32
      %50 = arith.divf %49, %cst_24 : f32
      %cst_25 = arith.constant 2.000000e+00 : f32
      %51 = vector.broadcast %cst_25 : f32 to vector<8x32xf32>
      %52 = arith.divf %19, %51 : vector<8x32xf32>
      %cst_26 = arith.constant dense<0xFF800000> : vector<8xf32>
      %53 = vector.multi_reduction <maximumf>, %52, %cst_26 [1] : vector<8x32xf32> to vector<8xf32>
      %54 = vector.shape_cast %53 : vector<8xf32> to vector<8x1xf32>
      %55 = vector.broadcast %54 : vector<8x1xf32> to vector<8x32xf32>
      %56 = arith.subf %52, %55 : vector<8x32xf32>
      %57 = math.exp %56 : vector<8x32xf32>
      %cst_27 = arith.constant dense<0.000000e+00> : vector<8xf32>
      %58 = vector.multi_reduction <add>, %57, %cst_27 [1] : vector<8x32xf32> to vector<8xf32>
      %59 = vector.shape_cast %58 : vector<8xf32> to vector<8x1xf32>
      %60 = math.log %59 : vector<8x1xf32>
      %61 = vector.broadcast %60 : vector<8x1xf32> to vector<8x32xf32>
      %62 = arith.subf %56, %61 : vector<8x32xf32>
      %cst_28 = arith.constant 2.000000e+00 : f32
      %63 = vector.broadcast %cst_28 : f32 to vector<8x32xf32>
      %64 = arith.divf %17, %63 : vector<8x32xf32>
      %cst_29 = arith.constant dense<0xFF800000> : vector<8xf32>
      %65 = vector.multi_reduction <maximumf>, %64, %cst_29 [1] : vector<8x32xf32> to vector<8xf32>
      %66 = vector.shape_cast %65 : vector<8xf32> to vector<8x1xf32>
      %67 = vector.broadcast %66 : vector<8x1xf32> to vector<8x32xf32>
      %68 = arith.subf %64, %67 : vector<8x32xf32>
      %69 = math.exp %68 : vector<8x32xf32>
      %cst_30 = arith.constant dense<0.000000e+00> : vector<8xf32>
      %70 = vector.multi_reduction <add>, %69, %cst_30 [1] : vector<8x32xf32> to vector<8xf32>
      %71 = vector.shape_cast %70 : vector<8xf32> to vector<8x1xf32>
      %72 = math.log %71 : vector<8x1xf32>
      %73 = vector.broadcast %72 : vector<8x1xf32> to vector<8x32xf32>
      %74 = arith.subf %68, %73 : vector<8x32xf32>
      %75 = math.exp %74 : vector<8x32xf32>
      %76 = arith.subf %74, %62 : vector<8x32xf32>
      %77 = arith.mulf %75, %76 : vector<8x32xf32>
      %cst_31 = arith.constant dense<0.000000e+00> : vector<8xf32>
      %78 = vector.multi_reduction <add>, %77, %cst_31 [1] : vector<8x32xf32> to vector<8xf32>
      %79 = vector.shape_cast %78 : vector<8xf32> to vector<8x1xf32>
      %80 = arith.mulf %79, %29 : vector<8x1xf32>
      %81 = vector.shape_cast %80 : vector<8x1xf32> to vector<1x8x1xf32>
      %cst_32 = arith.constant dense<0.000000e+00> : vector<1xf32>
      %82 = vector.multi_reduction <add>, %81, %cst_32 [1, 2] : vector<1x8x1xf32> to vector<1xf32>
      %83 = vector.shape_cast %82 : vector<1xf32> to vector<1x1x1xf32>
      %84 = vector.extract %83[0, 0, 0] : f32 from vector<1x1x1xf32>
      %cst_33 = arith.constant 4.000000e+00 : f32
      %85 = arith.mulf %84, %cst_33 : f32
      %cst_34 = arith.constant 6.400000e+01 : f32
      %86 = arith.divf %85, %cst_34 : f32
      %c0_35 = arith.constant 0 : index
      %c0_36 = arith.constant 0 : index
      %87 = memref.load %arg8[%c0_35, %c0_36] : memref<1x1xf32, #tpu.memory_space<smem>>
      %cst_37 = arith.constant 5.000000e-01 : f32
      %88 = arith.mulf %50, %cst_37 : f32
      %cst_38 = arith.constant 5.000000e-01 : f32
      %89 = arith.mulf %86, %cst_38 : f32
      %90 = arith.addf %88, %89 : f32
      %91 = arith.addf %87, %90 : f32
      %c0_39 = arith.constant 0 : index
      %c0_40 = arith.constant 0 : index
      %92 = memref.load %arg8[%c0_39, %c0_40] : memref<1x1xf32, #tpu.memory_space<smem>>
      memref.store %91, %arg8[%c0_39, %c0_40] : memref<1x1xf32, #tpu.memory_space<smem>>
    } else {
    }
    return
  }
  func.func @transform_0(%arg0: i32, %arg1: i32) -> (i32, i32) {
    %c0_i32 = arith.constant 0 : i32
    return %arg0, %arg1 : i32, i32
  }
  func.func @transform_1(%arg0: i32, %arg1: i32) -> (i32, i32) {
    %c0_i32 = arith.constant 0 : i32
    %c0_i32_0 = arith.constant 0 : i32
    return %arg1, %c0_i32 : i32, i32
  }
  func.func @transform_2(%arg0: i32, %arg1: i32) -> (i32, i32) {
    %c0_i32 = arith.constant 0 : i32
    %c0_i32_0 = arith.constant 0 : i32
    %c0_i32_1 = arith.constant 0 : i32
    return %c0_i32, %c0_i32_0 : i32, i32
  }
  func.func @transform_3(%arg0: i32, %arg1: i32) -> (i32, i32) {
    %c0_i32 = arith.constant 0 : i32
    %c0_i32_0 = arith.constant 0 : i32
    return %arg0, %c0_i32 : i32, i32
  }
  func.func @transform_4(%arg0: i32, %arg1: i32) -> (i32, i32) {
    %c0_i32 = arith.constant 0 : i32
    %c0_i32_0 = arith.constant 0 : i32
    return %arg0, %c0_i32 : i32, i32
  }
  func.func @transform_5(%arg0: i32, %arg1: i32) -> (i32, i32) {
    %c0_i32 = arith.constant 0 : i32
    %c0_i32_0 = arith.constant 0 : i32
    return %arg0, %c0_i32 : i32, i32
  }
  func.func @transform_6(%arg0: i32, %arg1: i32) -> (i32, i32) {
    %c0_i32 = arith.constant 0 : i32
    %c0_i32_0 = arith.constant 0 : i32
    %c0_i32_1 = arith.constant 0 : i32
    return %c0_i32, %c0_i32_0 : i32, i32
  }
}

</mosaic_0001>

<llo_original>
// kernel: tpu_custom_call.1
$region0: #{tpu_custom_call.1}
  #allocation0 [shape = 'u32[]', space=smem, size = 0x4, offset = 0x4, fixed_abs, tag = 'smem constant byte address 0x4 - core index']
  #allocation1 [shape = 'u32[144,128]{1,0:T(1,128)}', space=vmem, size = 0x12000, scoped, tag = 'internal scratch']
  #allocation2 [shape = 'f32[8,32]{1,0:T(8,128)}', space=vmem, size = 0x1000, scoped, tag = 'scratch operand']
  %s0 = inlined_call_operand.vmem [shape: bf16[8,1024], index: 0, kind: input, shape index: {}]
  %s1 = inlined_call_operand.vmem [shape: bf16[1024,32], index: 1, kind: input, shape index: {}]
  %s2 = inlined_call_operand.vmem [shape: f32[1,32], index: 2, kind: input, shape index: {}]
  %s3 = inlined_call_operand.vmem [shape: f32[8,32], index: 3, kind: input, shape index: {}]
  %s4 = inlined_call_operand.vmem [shape: f32[8,32], index: 4, kind: input, shape index: {}]
  %s5 = inlined_call_operand.vmem [shape: s32[8,1], index: 5, kind: input, shape index: {}]
  %s6 = inlined_call_operand.hbm [shape: f32[1,1], index: 6, kind: output, shape index: {}]
  %s7 = sld [smem:[#allocation0]]
  $region69: #{tpu_custom_call.1} parent=0
    _
  %s9 = ssub.s32 1, %s7
  %s10 = scalar_select 0, %s9, %s7
  $region1: #{tpu_custom_call.1} parent=0
    #allocation3 [shape = 'u8[512]{0}', space=smem, size = 0x200, scoped, tag = 'output window, operand 0, single buffered']
    #allocation4 [shape = 's32[2]{0}', space=sflag, size = 0x8, scoped, tag = 'scoped memory for tpu_custom_call.1']
    %11 = vsyncpa [#allocation4], 0
    loop: start=0, step=1, limit=4
    $region2: #{tpu_custom_call.1} parent=1 // loop_pre_header
      _
    $region3: #{tpu_custom_call.1} parent=1 // loop_header
      %s13 = sphi 0, %s17
      %p14 = scmp.ge.s32.totalorder %s13, 4
      %s20 = sphi 0, %s32
      %s21 = sphi 0, %s28
      %s22 = sphi 0, %s20
      %s23 = sphi 0, %s21
      %s24 = sphi 0, %s22
      %s25 = sphi 0, %s23
      %s37 = sphi 0, %s39
      %s40 = sphi 0, %s37
      %s41 = sphi 0, %s40
      %s57 = sphi 0, %s41
      %s63 = sphi 0, %s65
      %s66 = sphi 0, %s63
      %s67 = sphi 0, %s66
      %s83 = sphi 0, %s67
      %s87 = sphi 0, %s87
      %s89 = sphi 0, %s87
      %s90 = sphi 0, %s89
      %s104 = sphi 0, %s90
      %s110 = sphi 0, %s112
      %s113 = sphi 0, %s110
      %s114 = sphi 0, %s113
      %s130 = sphi 0, %s114
      %s136 = sphi 0, %s138
      %s139 = sphi 0, %s136
      %s140 = sphi 0, %s139
      %s156 = sphi 0, %s140
      %s162 = sphi 0, %s164
      %s165 = sphi 0, %s162
      %s166 = sphi 0, %s165
      %s182 = sphi 0, %s166
      %s186 = sphi 0, %s186
      %s188 = sphi 0, %s186
      %s189 = sphi 0, %s188
      %s203 = sphi 0, %s189
    $region4: #{tpu_custom_call.1} parent=1 // loop_header_branch
      %16 = sbr.rel (%p14) target = $region8
    $region5: #{tpu_custom_call.1} parent=1 // loop_body
      %s18 = ssub.s32 %s13, 1
      %s19 = ssub.s32 %s13, 2
      %s26 = sadd.s32 1, %s21
      %p27 = scmp.ge.s32.totalorder %s26, 2
      %s28 = scalar_select %p27, 0, %s26
      %s29 = sadd.s32 1, %s20
      %s30 = scalar_select %p27, %s29, %s20
      %p31 = scmp.ge.s32.totalorder %s30, 1
      %s32 = scalar_select %p31, 0, %s30
      %s33 = ssub.s32 %s20, %s32
      %s34 = ssub.s32 %s21, %s28
      %s35 = sor.u32 %s33, %s34
      %p36 = scmp.eq.s32.totalorder %s35, 0
      %s38 = sadd.s32 %s37, 1
      %s39 = scalar_select %p36, %s37, %s38
      %p42 = pneg %p36
      %p43 = scmp.eq.s32.totalorder %s13, 1
      %p44 = por %p42, %p43
      %p45 = scmp.ne.s32.totalorder %s37, %s40
      %p46 = scmp.eq.s32.totalorder %s13, 0
      %p47 = por %p45, %p46
      %p48 = scmp.ne.s32.totalorder %s37, %s40
      %p49 = scmp.eq.s32.totalorder %s18, 1
      %p50 = por %p48, %p49
      %p51 = scmp.ne.s32.totalorder %s40, %s41
      %p52 = scmp.eq.s32.totalorder %s18, 0
      %p53 = por %p51, %p52
      %p54 = scmp.ne.s32.totalorder %s40, %s41
      %p55 = scmp.eq.s32.totalorder %s19, 1
      %p56 = por %p54, %p55
      %p58 = scmp.ne.s32.totalorder %s41, %s57
      %p59 = scmp.eq.s32.totalorder %s19, 0
      %p60 = por %p58, %p59
      %s61 = ssub.s32 %s21, %s28
      %p62 = scmp.eq.s32.totalorder %s61, 0
      %s64 = sadd.s32 %s63, 1
      %s65 = scalar_select %p62, %s63, %s64
      %p68 = pneg %p62
      %p69 = scmp.eq.s32.totalorder %s13, 1
      %p70 = por %p68, %p69
      %p71 = scmp.ne.s32.totalorder %s63, %s66
      %p72 = scmp.eq.s32.totalorder %s13, 0
      %p73 = por %p71, %p72
      %p74 = scmp.ne.s32.totalorder %s63, %s66
      %p75 = scmp.eq.s32.totalorder %s18, 1
      %p76 = por %p74, %p75
      %p77 = scmp.ne.s32.totalorder %s66, %s67
      %p78 = scmp.eq.s32.totalorder %s18, 0
      %p79 = por %p77, %p78
      %p80 = scmp.ne.s32.totalorder %s66, %s67
      %p81 = scmp.eq.s32.totalorder %s19, 1
      %p82 = por %p80, %p81
      %p84 = scmp.ne.s32.totalorder %s67, %s83
      %p85 = scmp.eq.s32.totalorder %s19, 0
      %p86 = por %p84, %p85
      %s88 = sadd.s32 %s87, 1
      %p91 = scmp.eq.s32.totalorder %s13, 1
      %p92 = scmp.ne.s32.totalorder %s87, %s89
      %p93 = scmp.eq.s32.totalorder %s13, 0
      %p94 = por %p92, %p93
      %p95 = scmp.ne.s32.totalorder %s87, %s89
      %p96 = scmp.eq.s32.totalorder %s18, 1
      %p97 = por %p95, %p96
      %p98 = scmp.ne.s32.totalorder %s89, %s90
      %p99 = scmp.eq.s32.totalorder %s18, 0
      %p100 = por %p98, %p99
      %p101 = scmp.ne.s32.totalorder %s89, %s90
      %p102 = scmp.eq.s32.totalorder %s19, 1
      %p103 = por %p101, %p102
      %p105 = scmp.ne.s32.totalorder %s90, %s104
      %p106 = scmp.eq.s32.totalorder %s19, 0
      %p107 = por %p105, %p106
      %s108 = ssub.s32 %s20, %s32
      %p109 = scmp.eq.s32.totalorder %s108, 0
      %s111 = sadd.s32 %s110, 1
      %s112 = scalar_select %p109, %s110, %s111
      %p115 = pneg %p109
      %p116 = scmp.eq.s32.totalorder %s13, 1
      %p117 = por %p115, %p116
      %p118 = scmp.ne.s32.totalorder %s110, %s113
      %p119 = scmp.eq.s32.totalorder %s13, 0
      %p120 = por %p118, %p119
      %p121 = scmp.ne.s32.totalorder %s110, %s113
      %p122 = scmp.eq.s32.totalorder %s18, 1
      %p123 = por %p121, %p122
      %p124 = scmp.ne.s32.totalorder %s113, %s114
      %p125 = scmp.eq.s32.totalorder %s18, 0
      %p126 = por %p124, %p125
      %p127 = scmp.ne.s32.totalorder %s113, %s114
      %p128 = scmp.eq.s32.totalorder %s19, 1
      %p129 = por %p127, %p128
      %p131 = scmp.ne.s32.totalorder %s114, %s130
      %p132 = scmp.eq.s32.totalorder %s19, 0
      %p133 = por %p131, %p132
      %s134 = ssub.s32 %s20, %s32
      %p135 = scmp.eq.s32.totalorder %s134, 0
      %s137 = sadd.s32 %s136, 1
      %s138 = scalar_select %p135, %s136, %s137
      %p141 = pneg %p135
      %p142 = scmp.eq.s32.totalorder %s13, 1
      %p143 = por %p141, %p142
      %p144 = scmp.ne.s32.totalorder %s136, %s139
      %p145 = scmp.eq.s32.totalorder %s13, 0
      %p146 = por %p144, %p145
      %p147 = scmp.ne.s32.totalorder %s136, %s139
      %p148 = scmp.eq.s32.totalorder %s18, 1
      %p149 = por %p147, %p148
      %p150 = scmp.ne.s32.totalorder %s139, %s140
      %p151 = scmp.eq.s32.totalorder %s18, 0
      %p152 = por %p150, %p151
      %p153 = scmp.ne.s32.totalorder %s139, %s140
      %p154 = scmp.eq.s32.totalorder %s19, 1
      %p155 = por %p153, %p154
      %p157 = scmp.ne.s32.totalorder %s140, %s156
      %p158 = scmp.eq.s32.totalorder %s19, 0
      %p159 = por %p157, %p158
      %s160 = ssub.s32 %s20, %s32
      %p161 = scmp.eq.s32.totalorder %s160, 0
      %s163 = sadd.s32 %s162, 1
      %s164 = scalar_select %p161, %s162, %s163
      %p167 = pneg %p161
      %p168 = scmp.eq.s32.totalorder %s13, 1
      %p169 = por %p167, %p168
      %p170 = scmp.ne.s32.totalorder %s162, %s165
      %p171 = scmp.eq.s32.totalorder %s13, 0
      %p172 = por %p170, %p171
      %p173 = scmp.ne.s32.totalorder %s162, %s165
      %p174 = scmp.eq.s32.totalorder %s18, 1
      %p175 = por %p173, %p174
      %p176 = scmp.ne.s32.totalorder %s165, %s166
      %p177 = scmp.eq.s32.totalorder %s18, 0
      %p178 = por %p176, %p177
      %p179 = scmp.ne.s32.totalorder %s165, %s166
      %p180 = scmp.eq.s32.totalorder %s19, 1
      %p181 = por %p179, %p180
      %p183 = scmp.ne.s32.totalorder %s166, %s182
      %p184 = scmp.eq.s32.totalorder %s19, 0
      %p185 = por %p183, %p184
      %s187 = sadd.s32 %s186, 1
      %p190 = scmp.eq.s32.totalorder %s13, 1
      %p191 = scmp.ne.s32.totalorder %s186, %s188
      %p192 = scmp.eq.s32.totalorder %s13, 0
      %p193 = por %p191, %p192
      %p194 = scmp.ne.s32.totalorder %s186, %s188
      %p195 = scmp.eq.s32.totalorder %s18, 1
      %p196 = por %p194, %p195
      %p197 = scmp.ne.s32.totalorder %s188, %s189
      %p198 = scmp.eq.s32.totalorder %s18, 0
      %p199 = por %p197, %p198
      %p200 = scmp.ne.s32.totalorder %s188, %s189
      %p201 = scmp.eq.s32.totalorder %s19, 1
      %p202 = por %p200, %p201
      %p204 = scmp.ne.s32.totalorder %s189, %s203
      %p205 = scmp.eq.s32.totalorder %s19, 0
      %p206 = por %p204, %p205
      %p207 = scmp.le.s32.totalorder 1, %s13
      %p208 = scmp.lt.s32.totalorder %s13, 3
      %p209 = pnand %p207, %p208
      %p210 = pneg %p209
      // Predicated region
      $region9: #{tpu_custom_call.1} parent=5 // pred_check
        _
      $region10: #{tpu_custom_call.1} parent=5 // pred_check_branch
        %212 = sbr.rel (%p209) target = $region12
      $region11: #{tpu_custom_call.1} parent=5 // pred_region
        %s213 = ssub.s32 %s13, 1
        // Predicated region
        $region13: #{tpu_custom_call.1} parent=11 // pred_check
          %p214 = pneg %p100
        $region14: #{tpu_custom_call.1} parent=11 // pred_check_branch
          %216 = sbr.rel (%p214) target = $region16
        $region15: #{tpu_custom_call.1} parent=11 // pred_region
          _
        $region16: #{tpu_custom_call.1} parent=11 // pred_fallthru
          _
        // Predicated region
        $region17: #{tpu_custom_call.1} parent=11 // pred_check
          %p217 = pneg %p126
        $region18: #{tpu_custom_call.1} parent=11 // pred_check_branch
          %219 = sbr.rel (%p217) target = $region20
        $region19: #{tpu_custom_call.1} parent=11 // pred_region
          %p220 = scmp.lt.s32.totalorder %s22, 0
          %s221 = scalar_select %p220, %s22, 0
          %s222 = smul.addr %s221, 8
          %s223 = scalar_lea.vmem %s3, %s222
        $region20: #{tpu_custom_call.1} parent=11 // pred_fallthru
          _
        // Predicated region
        $region21: #{tpu_custom_call.1} parent=11 // pred_check
          %p224 = pneg %p152
        $region22: #{tpu_custom_call.1} parent=11 // pred_check_branch
          %226 = sbr.rel (%p224) target = $region24
        $region23: #{tpu_custom_call.1} parent=11 // pred_region
          %p227 = scmp.lt.s32.totalorder %s22, 0
          %s228 = scalar_select %p227, %s22, 0
          %s229 = smul.addr %s228, 8
          %s230 = scalar_lea.vmem %s4, %s229
        $region24: #{tpu_custom_call.1} parent=11 // pred_fallthru
          _
        // Predicated region
        $region25: #{tpu_custom_call.1} parent=11 // pred_check
          %p231 = pneg %p178
        $region26: #{tpu_custom_call.1} parent=11 // pred_check_branch
          %233 = sbr.rel (%p231) target = $region28
        $region27: #{tpu_custom_call.1} parent=11 // pred_region
          %p234 = scmp.lt.s32.totalorder %s22, 0
          %s235 = scalar_select %p234, %s22, 0
          %s236 = smul.addr %s235, 8
          %s237 = scalar_lea.vmem %s5, %s236
        $region28: #{tpu_custom_call.1} parent=11 // pred_fallthru
          _
      $region12: #{tpu_custom_call.1} parent=5 // pred_fallthru
        _
      %p238 = scmp.lt.s32.totalorder %s13, 2
      // Predicated region
      $region29: #{tpu_custom_call.1} parent=5 // pred_check
        %p239 = pneg %p238
      $region30: #{tpu_custom_call.1} parent=5 // pred_check_branch
        %241 = sbr.rel (%p239) target = $region32
      $region31: #{tpu_custom_call.1} parent=5 // pred_region
        // Predicated region
        $region33: #{tpu_custom_call.1} parent=31 // pred_check
          %p242 = pneg %p47
        $region34: #{tpu_custom_call.1} parent=31 // pred_check_branch
          %244 = sbr.rel (%p242) target = $region36
        $region35: #{tpu_custom_call.1} parent=31 // pred_region
          %s245 = smul.u32 4, %s21
          %p246 = scmp.lt.s32.totalorder %s20, 0
          %s247 = scalar_select %p246, %s20, 0
          %p248 = scmp.lt.s32.totalorder %s245, 7
          %s249 = scalar_select %p248, %s245, 7
          %s250 = smul.addr %s247, 8
          %s251 = sadd.s32 %s249, %s250
          %s252 = smul.addr %s251, 4
          %s253 = scalar_lea.vmem %s0, %s252
          %s254 = smul.u32 4, %s21
        $region36: #{tpu_custom_call.1} parent=31 // pred_fallthru
          _
        // Predicated region
        $region37: #{tpu_custom_call.1} parent=31 // pred_check
          %p255 = pneg %p73
        $region38: #{tpu_custom_call.1} parent=31 // pred_check_branch
          %257 = sbr.rel (%p255) target = $region40
        $region39: #{tpu_custom_call.1} parent=31 // pred_region
          %s258 = smul.u32 64, %s21
          %p259 = scmp.lt.s32.totalorder %s258, 127
          %s260 = scalar_select %p259, %s258, 127
          %s261 = smul.addr %s260, 4
          %s262 = scalar_lea.vmem %s1, %s261
          %s263 = smul.u32 64, %s21
        $region40: #{tpu_custom_call.1} parent=31 // pred_fallthru
          _
      $region32: #{tpu_custom_call.1} parent=5 // pred_fallthru
        _
      %p264 = scmp.le.s32.totalorder 1, %s13
      %p265 = scmp.lt.s32.totalorder %s13, 3
      %p266 = pnand %p264, %p265
      %p267 = pneg %p266
      // Predicated region
      $region41: #{tpu_custom_call.1} parent=5 // pred_check
        _
      $region42: #{tpu_custom_call.1} parent=5 // pred_check_branch
        %269 = sbr.rel (%p266) target = $region44
      $region43: #{tpu_custom_call.1} parent=5 // pred_region
        %s270 = ssub.s32 %s13, 1
        %s271 = smul.u32 4, %s23
        %p272 = scmp.lt.s32.totalorder %s22, 0
        %s273 = scalar_select %p272, %s22, 0
        %p274 = scmp.lt.s32.totalorder %s271, 7
        %s275 = scalar_select %p274, %s271, 7
        %s276 = smul.addr %s273, 8
        %s277 = sadd.s32 %s275, %s276
        %s278 = smul.addr %s277, 4
        %s279 = scalar_lea.vmem %s0, %s278
        %p280 = pneg %p53
        %p281 = pneg %p50
        %s282 = smul.u32 64, %s23
        %p283 = scmp.lt.s32.totalorder %s282, 127
        %s284 = scalar_select %p283, %s282, 127
        %s285 = smul.addr %s284, 4
        %s286 = scalar_lea.vmem %s1, %s285
        %p287 = pneg %p79
        %p288 = pneg %p76
        %p289 = pneg %p100
        %p290 = pneg %p97
        %p291 = scmp.lt.s32.totalorder %s22, 0
        %s292 = scalar_select %p291, %s22, 0
        %s293 = smul.addr %s292, 8
        %s294 = scalar_lea.vmem %s3, %s293
        %p295 = pneg %p126
        %p296 = pneg %p123
        %p297 = scmp.lt.s32.totalorder %s22, 0
        %s298 = scalar_select %p297, %s22, 0
        %s299 = smul.addr %s298, 8
        %s300 = scalar_lea.vmem %s4, %s299
        %p301 = pneg %p152
        %p302 = pneg %p149
        %p303 = scmp.lt.s32.totalorder %s22, 0
        %s304 = scalar_select %p303, %s22, 0
        %s305 = smul.addr %s304, 8
        %s306 = scalar_lea.vmem %s5, %s305
        %p307 = pneg %p178
        %p308 = pneg %p175
        %p309 = pneg %p199
        %p310 = pneg %p196
        %s311 = smul.u32 4, %s23
        %p312 = scmp.lt.s32.totalorder %s22, 0
        %s313 = scalar_select %p312, %s22, 0
        %p314 = scmp.lt.s32.totalorder %s311, 7
        %s315 = scalar_select %p314, %s311, 7
        %s316 = smul.addr %s313, 8
        %s317 = sadd.s32 %s315, %s316
        %s318 = smul.addr %s317, 4
        %s319 = scalar_lea.vmem %s0, %s318
        %s320 = smul.u32 4, %s23
        %s321 = smul.u32 64, %s23
        %p322 = scmp.lt.s32.totalorder %s321, 127
        %s323 = scalar_select %p322, %s321, 127
        %s324 = smul.addr %s323, 4
        %s325 = scalar_lea.vmem %s1, %s324
        %s326 = smul.u32 64, %s23
        %p327 = scmp.lt.s32.totalorder %s22, 0
        %s328 = scalar_select %p327, %s22, 0
        %s329 = smul.addr %s328, 8
        %s330 = scalar_lea.vmem %s3, %s329
        %p331 = scmp.lt.s32.totalorder %s22, 0
        %s332 = scalar_select %p331, %s22, 0
        %s333 = smul.addr %s332, 8
        %s334 = scalar_lea.vmem %s4, %s333
        %p335 = scmp.lt.s32.totalorder %s22, 0
        %s336 = scalar_select %p335, %s22, 0
        %s337 = smul.addr %s336, 8
        %s338 = scalar_lea.vmem %s5, %s337
        %p340 = scmp.eq.s32.totalorder %s22, 0
        %p341 = scmp.eq.s32.totalorder %s23, 0
        %p342 = pnand %p340, %p341
        %p343 = pneg %p342
        // Predicated region
        $region45: #{tpu_custom_call.1} parent=43 // pred_check
          _
        $region46: #{tpu_custom_call.1} parent=43 // pred_check_branch
          %345 = sbr.rel (%p342) target = $region48
        $region47: #{tpu_custom_call.1} parent=43 // pred_region
          %s346 = scalar_lea.smem [#allocation3], 0
          %347 = sst [smem:[%s346]] 0.0
        $region48: #{tpu_custom_call.1} parent=43 // pred_fallthru
          _
        // Predicated region
        $region49: #{tpu_custom_call.1} parent=43 // pred_check
          %p348 = pneg %p341
        $region50: #{tpu_custom_call.1} parent=43 // pred_check_branch
          %350 = sbr.rel (%p348) target = $region52
        $region51: #{tpu_custom_call.1} parent=43 // pred_region
          %v351 = vld [vmem:[%s2] sm:$0x1]
          %v353 = vlaneseq
          %v354 = vshrl.u32 %v353, 7
          %v355 = vsub.s32 0, %v354
          %v356 = vrot.slane %v351, %v355
          %vm358 = vcmask 261120
          %359 = vst.msk [vmem:[#allocation2] sm:$0xff] %vm358, %v356
        $region52: #{tpu_custom_call.1} parent=43 // pred_fallthru
          _
        %v360 = vld [vmem:[#allocation2] sm:$0xff]
        %v361 = vld [vmem:[%s319] sm:$0xff]
        %v362 = vld [vmem:[%s319 + $0x8] sm:$0xff]
        %v363 = vld [vmem:[%s325] sm:$0xf]
        %v364 = vld [vmem:[%s325 + $0x4] sm:$0xf]
        %v365 = vld [vmem:[%s325 + $0x8] sm:$0xf]
        %v366 = vld [vmem:[%s325 + $0xc] sm:$0xf]
        %v367 = vld [vmem:[%s325 + $0x10] sm:$0xf]
        %v368 = vld [vmem:[%s325 + $0x14] sm:$0xf]
        %v369 = vld [vmem:[%s325 + $0x18] sm:$0xf]
        %v370 = vld [vmem:[%s325 + $0x1c] sm:$0xf]
        %v371 = vld [vmem:[%s325 + $0x20] sm:$0xf]
        %v372 = vld [vmem:[%s325 + $0x24] sm:$0xf]
        %v373 = vld [vmem:[%s325 + $0x28] sm:$0xf]
        %v374 = vld [vmem:[%s325 + $0x2c] sm:$0xf]
        %v375 = vld [vmem:[%s325 + $0x30] sm:$0xf]
        %v376 = vld [vmem:[%s325 + $0x34] sm:$0xf]
        %v377 = vld [vmem:[%s325 + $0x38] sm:$0xf]
        %v378 = vld [vmem:[%s325 + $0x3c] sm:$0xf]
        %v379 = vld [vmem:[%s325 + $0x40] sm:$0xf]
        %v380 = vld [vmem:[%s325 + $0x44] sm:$0xf]
        %v381 = vld [vmem:[%s325 + $0x48] sm:$0xf]
        %v382 = vld [vmem:[%s325 + $0x4c] sm:$0xf]
        %v383 = vld [vmem:[%s325 + $0x50] sm:$0xf]
        %v384 = vld [vmem:[%s325 + $0x54] sm:$0xf]
        %v385 = vld [vmem:[%s325 + $0x58] sm:$0xf]
        %v386 = vld [vmem:[%s325 + $0x5c] sm:$0xf]
        %v387 = vld [vmem:[%s325 + $0x60] sm:$0xf]
        %v388 = vld [vmem:[%s325 + $0x64] sm:$0xf]
        %v389 = vld [vmem:[%s325 + $0x68] sm:$0xf]
        %v390 = vld [vmem:[%s325 + $0x6c] sm:$0xf]
        %v391 = vld [vmem:[%s325 + $0x70] sm:$0xf]
        %v392 = vld [vmem:[%s325 + $0x74] sm:$0xf]
        %v393 = vld [vmem:[%s325 + $0x78] sm:$0xf]
        %v394 = vld [vmem:[%s325 + $0x7c] sm:$0xf]
        %v395 = vld [vmem:[%s325 + $0x80] sm:$0xf]
        %v396 = vld [vmem:[%s325 + $0x84] sm:$0xf]
        %v397 = vld [vmem:[%s325 + $0x88] sm:$0xf]
        %v398 = vld [vmem:[%s325 + $0x8c] sm:$0xf]
        %v399 = vld [vmem:[%s325 + $0x90] sm:$0xf]
        %v400 = vld [vmem:[%s325 + $0x94] sm:$0xf]
        %v401 = vld [vmem:[%s325 + $0x98] sm:$0xf]
        %v402 = vld [vmem:[%s325 + $0x9c] sm:$0xf]
        %v403 = vld [vmem:[%s325 + $0xa0] sm:$0xf]
        %v404 = vld [vmem:[%s325 + $0xa4] sm:$0xf]
        %v405 = vld [vmem:[%s325 + $0xa8] sm:$0xf]
        %v406 = vld [vmem:[%s325 + $0xac] sm:$0xf]
        %v407 = vld [vmem:[%s325 + $0xb0] sm:$0xf]
        %v408 = vld [vmem:[%s325 + $0xb4] sm:$0xf]
        %v409 = vld [vmem:[%s325 + $0xb8] sm:$0xf]
        %v410 = vld [vmem:[%s325 + $0xbc] sm:$0xf]
        %v411 = vld [vmem:[%s325 + $0xc0] sm:$0xf]
        %v412 = vld [vmem:[%s325 + $0xc4] sm:$0xf]
        %v413 = vld [vmem:[%s325 + $0xc8] sm:$0xf]
        %v414 = vld [vmem:[%s325 + $0xcc] sm:$0xf]
        %v415 = vld [vmem:[%s325 + $0xd0] sm:$0xf]
        %v416 = vld [vmem:[%s325 + $0xd4] sm:$0xf]
        %v417 = vld [vmem:[%s325 + $0xd8] sm:$0xf]
        %v418 = vld [vmem:[%s325 + $0xdc] sm:$0xf]
        %v419 = vld [vmem:[%s325 + $0xe0] sm:$0xf]
        %v420 = vld [vmem:[%s325 + $0xe4] sm:$0xf]
        %v421 = vld [vmem:[%s325 + $0xe8] sm:$0xf]
        %v422 = vld [vmem:[%s325 + $0xec] sm:$0xf]
        %v423 = vld [vmem:[%s325 + $0xf0] sm:$0xf]
        %v424 = vld [vmem:[%s325 + $0xf4] sm:$0xf]
        %v425 = vld [vmem:[%s325 + $0xf8] sm:$0xf]
        %v426 = vld [vmem:[%s325 + $0xfc] sm:$0xf]
        %v429 = vunpack.c.l.b16 %v361
        %v430 = vunpack.c.h.b16 %v361
        %v431 = vunpack.c.l.b16 %v362
        %v432 = vunpack.c.h.b16 %v362
        %v433 = vpack.c.b16 %v429, %v429
        %v434 = vpack.c.b16 %v430, %v430
        %v435 = vpack.c.b16 %v431, %v431
        %v436 = vpack.c.b16 %v432, %v432
        %v505 = vunpack.c.l.b16 %v363
        %v506 = vunpack.c.l.b16 %v364
        %v507 = vunpack.c.l.b16 %v365
        %v508 = vunpack.c.l.b16 %v366
        %v509 = vunpack.c.l.b16 %v367
        %v510 = vunpack.c.l.b16 %v368
        %v511 = vunpack.c.l.b16 %v369
        %v512 = vunpack.c.l.b16 %v370
        %v513 = vunpack.c.l.b16 %v371
        %v514 = vunpack.c.l.b16 %v372
        %v515 = vunpack.c.l.b16 %v373
        %v516 = vunpack.c.l.b16 %v374
        %v517 = vunpack.c.l.b16 %v375
        %v518 = vunpack.c.l.b16 %v376
        %v519 = vunpack.c.l.b16 %v377
        %v520 = vunpack.c.l.b16 %v378
        %v521 = vunpack.c.l.b16 %v379
        %v522 = vunpack.c.l.b16 %v380
        %v523 = vunpack.c.l.b16 %v381
        %v524 = vunpack.c.l.b16 %v382
        %v525 = vunpack.c.l.b16 %v383
        %v526 = vunpack.c.l.b16 %v384
        %v527 = vunpack.c.l.b16 %v385
        %v528 = vunpack.c.l.b16 %v386
        %v529 = vunpack.c.l.b16 %v387
        %v530 = vunpack.c.l.b16 %v388
        %v531 = vunpack.c.l.b16 %v389
        %v532 = vunpack.c.l.b16 %v390
        %v533 = vunpack.c.l.b16 %v391
        %v534 = vunpack.c.l.b16 %v392
        %v535 = vunpack.c.l.b16 %v393
        %v536 = vunpack.c.l.b16 %v394
        %v537 = vunpack.c.l.b16 %v395
        %v538 = vunpack.c.l.b16 %v396
        %v539 = vunpack.c.l.b16 %v397
        %v540 = vunpack.c.l.b16 %v398
        %v541 = vunpack.c.l.b16 %v399
        %v542 = vunpack.c.l.b16 %v400
        %v543 = vunpack.c.l.b16 %v401
        %v544 = vunpack.c.l.b16 %v402
        %v545 = vunpack.c.l.b16 %v403
        %v546 = vunpack.c.l.b16 %v404
        %v547 = vunpack.c.l.b16 %v405
        %v548 = vunpack.c.l.b16 %v406
        %v549 = vunpack.c.l.b16 %v407
        %v550 = vunpack.c.l.b16 %v408
        %v551 = vunpack.c.l.b16 %v409
        %v552 = vunpack.c.l.b16 %v410
        %v553 = vunpack.c.l.b16 %v411
        %v554 = vunpack.c.l.b16 %v412
        %v555 = vunpack.c.l.b16 %v413
        %v556 = vunpack.c.l.b16 %v414
        %v557 = vunpack.c.l.b16 %v415
        %v558 = vunpack.c.l.b16 %v416
        %v559 = vunpack.c.l.b16 %v417
        %v560 = vunpack.c.l.b16 %v418
        %v561 = vunpack.c.l.b16 %v419
        %v562 = vunpack.c.l.b16 %v420
        %v563 = vunpack.c.l.b16 %v421
        %v564 = vunpack.c.l.b16 %v422
        %v565 = vunpack.c.l.b16 %v423
        %v566 = vunpack.c.l.b16 %v424
        %v567 = vunpack.c.l.b16 %v425
        %v568 = vunpack.c.l.b16 %v426
        %v569 = vpack.c.b16 %v506, %v505
        %v570 = vpack.c.b16 %v508, %v507
        %v571 = vpack.c.b16 %v510, %v509
        %v572 = vpack.c.b16 %v512, %v511
        %v573 = vpack.c.b16 %v514, %v513
        %v574 = vpack.c.b16 %v516, %v515
        %v575 = vpack.c.b16 %v518, %v517
        %v576 = vpack.c.b16 %v520, %v519
        %v577 = vpack.c.b16 %v522, %v521
        %v578 = vpack.c.b16 %v524, %v523
        %v579 = vpack.c.b16 %v526, %v525
        %v580 = vpack.c.b16 %v528, %v527
        %v581 = vpack.c.b16 %v530, %v529
        %v582 = vpack.c.b16 %v532, %v531
        %v583 = vpack.c.b16 %v534, %v533
        %v584 = vpack.c.b16 %v536, %v535
        %v585 = vpack.c.b16 %v538, %v537
        %v586 = vpack.c.b16 %v540, %v539
        %v587 = vpack.c.b16 %v542, %v541
        %v588 = vpack.c.b16 %v544, %v543
        %v589 = vpack.c.b16 %v546, %v545
        %v590 = vpack.c.b16 %v548, %v547
        %v591 = vpack.c.b16 %v550, %v549
        %v592 = vpack.c.b16 %v552, %v551
        %v593 = vpack.c.b16 %v554, %v553
        %v594 = vpack.c.b16 %v556, %v555
        %v595 = vpack.c.b16 %v558, %v557
        %v596 = vpack.c.b16 %v560, %v559
        %v597 = vpack.c.b16 %v562, %v561
        %v598 = vpack.c.b16 %v564, %v563
        %v599 = vpack.c.b16 %v566, %v565
        %v600 = vpack.c.b16 %v568, %v567
        %633 = vmatprep.subr.bf16.mxu0 0
        %634 = vmatpush1.bf16.msra.mxu0 %v576
        %635 = vmatprep.subr.bf16.mxu0 0
        %636 = vmatpush1.bf16.msra.mxu0 %v575
        %637 = vmatprep.subr.bf16.mxu0 0
        %638 = vmatpush1.bf16.msra.mxu0 %v574
        %639 = vmatprep.subr.bf16.mxu0 0
        %640 = vmatpush1.bf16.msra.mxu0 %v573
        %641 = vmatprep.subr.bf16.mxu0 0
        %642 = vmatpush1.bf16.msra.mxu0 %v572
        %643 = vmatprep.subr.bf16.mxu0 0
        %644 = vmatpush1.bf16.msra.mxu0 %v571
        %645 = vmatprep.subr.bf16.mxu0 0
        %646 = vmatpush1.bf16.msra.mxu0 %v570
        %647 = vmatprep.subr.bf16.mxu0 0
        %648 = vmatpush1.bf16.msra.mxu0 %v569
        %649 = vmatprep.subr.bf16.mxu0 0
        %650 = vmatpush2.bf16.msra.mxu0 %v584
        %651 = vmatprep.subr.bf16.mxu0 0
        %652 = vmatpush2.bf16.msra.mxu0 %v583
        %653 = vmatprep.subr.bf16.mxu0 0
        %654 = vmatpush2.bf16.msra.mxu0 %v582
        %655 = vmatprep.subr.bf16.mxu0 0
        %656 = vmatpush2.bf16.msra.mxu0 %v581
        %657 = vmatprep.subr.bf16.mxu0 0
        %658 = vmatpush2.bf16.msra.mxu0 %v580
        %659 = vmatprep.subr.bf16.mxu0 0
        %660 = vmatpush2.bf16.msra.mxu0 %v579
        %661 = vmatprep.subr.bf16.mxu0 0
        %662 = vmatpush2.bf16.msra.mxu0 %v578
        %663 = vmatprep.subr.bf16.mxu0 0
        %664 = vmatpush2.bf16.msra.mxu0 %v577
        %665 = vmatprep.mubr.bf16.mxu0 %v434
        %666 = vmatmul.mubr.bf16.gmra.mxu0 %v433
        %v667 = vpop.f32.mrf.mxu0
        %v668 = vadd.f32 0.0, %v667
        %v669 = vpop.f32.mrf.mxu0
        %v670 = vpop.f32.mrf.mxu0
        %v671 = vpop.f32.mrf.mxu0
        %672 = vdwg.mxu0
        %673 = vmatprep.subr.bf16.mxu0 0
        %674 = vmatpush1.bf16.msra.mxu0 %v592
        %675 = vmatprep.subr.bf16.mxu0 0
        %676 = vmatpush1.bf16.msra.mxu0 %v591
        %677 = vmatprep.subr.bf16.mxu0 0
        %678 = vmatpush1.bf16.msra.mxu0 %v590
        %679 = vmatprep.subr.bf16.mxu0 0
        %680 = vmatpush1.bf16.msra.mxu0 %v589
        %681 = vmatprep.subr.bf16.mxu0 0
        %682 = vmatpush1.bf16.msra.mxu0 %v588
        %683 = vmatprep.subr.bf16.mxu0 0
        %684 = vmatpush1.bf16.msra.mxu0 %v587
        %685 = vmatprep.subr.bf16.mxu0 0
        %686 = vmatpush1.bf16.msra.mxu0 %v586
        %687 = vmatprep.subr.bf16.mxu0 0
        %688 = vmatpush1.bf16.msra.mxu0 %v585
        %689 = vmatprep.subr.bf16.mxu0 0
        %690 = vmatpush2.bf16.msra.mxu0 %v600
        %691 = vmatprep.subr.bf16.mxu0 0
        %692 = vmatpush2.bf16.msra.mxu0 %v599
        %693 = vmatprep.subr.bf16.mxu0 0
        %694 = vmatpush2.bf16.msra.mxu0 %v598
        %695 = vmatprep.subr.bf16.mxu0 0
        %696 = vmatpush2.bf16.msra.mxu0 %v597
        %697 = vmatprep.subr.bf16.mxu0 0
        %698 = vmatpush2.bf16.msra.mxu0 %v596
        %699 = vmatprep.subr.bf16.mxu0 0
        %700 = vmatpush2.bf16.msra.mxu0 %v595
        %701 = vmatprep.subr.bf16.mxu0 0
        %702 = vmatpush2.bf16.msra.mxu0 %v594
        %703 = vmatprep.subr.bf16.mxu0 0
        %704 = vmatpush2.bf16.msra.mxu0 %v593
        %705 = vmatprep.mubr.bf16.mxu0 %v436
        %706 = vmatmul.mubr.bf16.gmra.mxu0 %v435
        %v707 = vpop.f32.mrf.mxu0
        %v708 = vadd.f32 %v668, %v707
        %v709 = vpop.f32.mrf.mxu0
        %v710 = vpop.f32.mrf.mxu0
        %v711 = vpop.f32.mrf.mxu0
        %712 = vdwg.mxu0
        %v713 = vadd.f32 %v360, %v708
        %vm714 = vcmask 261120
        %715 = vst.msk [vmem:[#allocation2] sm:$0xff] %vm714, %v713
        %p716 = scmp.eq.s32.totalorder %s23, 1
        // Predicated region
        $region53: #{tpu_custom_call.1} parent=43 // pred_check
          %p717 = pneg %p716
        $region54: #{tpu_custom_call.1} parent=43 // pred_check_branch
          %719 = sbr.rel (%p717) target = $region56
        $region55: #{tpu_custom_call.1} parent=43 // pred_region
          %v720 = vld [vmem:[#allocation2] sm:$0xff]
          %v721 = vld [vmem:[%s330] sm:$0xff]
          %v722 = vld [vmem:[%s334] sm:$0xff]
          %v723 = vld [vmem:[%s338] sm:$0xff]
          %v724 = vlaneseq
          %v725 = vand.u32 %v724, 127
          %s726 = smul.u32 %s22, 8
          %v727 = vlaneseq
          %v728 = vshrl.u32 %v727, 7
          %v729 = vstv %s726
          %v730 = vadd.s32 %v729, %v728
          %vm731 = vcmp.lt.s32.totalorder %v730, 2
          %v732 = vsel %vm731, 1, 0
          %v733 = vcvt.s32.f32 %v732
          %734 = vset.pattern.permute.xlu0 0
          %735 = vperm.xlu0 %734, %v723
          %v736 = vpop.permute.xlu0 %735
          %vm737 = vcmp.eq.s32.totalorder %v725, %v736
          %v738 = vsel %vm737, 1, 0
          %v739 = vcvt.s32.f32 %v738
          %v740 = vsel %vm714, %v721, -inf
          %741 = vmax.xlane.f32.xlu0 %v740
          %v742 = vpop.xlane.xlu0 %741
          %v743 = vsub.f32 %v721, %v742
          %v744 = vmul.f32 %v743, 1.442695
          %v745 = vpow.pop %v744
          %v746 = vsel %vm714, %v745, 0.0
          %747 = vadd.xlane.f32.xlu0 %v746
          %v748 = vpop.xlane.xlu0 %747
          %v749 = vlog2.pop %v748
          %v750 = vmul.f32 %v749, 0.6931472
          %v751 = vsub.f32 %v743, %v750
          %v752 = vmul.f32 %v739, %v751
          %v753 = vsel %vm714, %v752, 0.0
          %754 = vadd.xlane.f32.xlu0 %v753
          %v755 = vpop.xlane.xlu0 %754
          %v756 = vrot.slane %v755, 4
          %v757 = vadd.f32 %v755, %v756
          %v758 = vrot.slane %v757, 2
          %v759 = vadd.f32 %v757, %v758
          %v760 = vrot.slane %v759, 1
          %v761 = vadd.f32 %v759, %v760
          %s762 = vtos %v761
          %s763 = ssub.f32 0.0, %s762
          %v764 = vrcp.pop 2.0
          %s765 = vtos %v764
          %s766 = smul.f32 %s763, %s765
          %v767 = vrcp.pop 2.0
          %v768 = vmul.f32 %v722, %v767
          %v769 = vsel %vm714, %v768, -inf
          %770 = vmax.xlane.f32.xlu0 %v769
          %v771 = vpop.xlane.xlu0 %770
          %v772 = vsub.f32 %v768, %v771
          %v773 = vmul.f32 %v772, 1.442695
          %v774 = vpow.pop %v773
          %v775 = vsel %vm714, %v774, 0.0
          %776 = vadd.xlane.f32.xlu0 %v775
          %v777 = vpop.xlane.xlu0 %776
          %v778 = vlog2.pop %v777
          %v779 = vmul.f32 %v778, 0.6931472
          %v780 = vsub.f32 %v772, %v779
          %v781 = vmul.f32 %v720, %v767
          %v782 = vsel %vm714, %v781, -inf
          %783 = vmax.xlane.f32.xlu0 %v782
          %v784 = vpop.xlane.xlu0 %783
          %v785 = vsub.f32 %v781, %v784
          %v786 = vmul.f32 %v785, 1.442695
          %v787 = vpow.pop %v786
          %v788 = vsel %vm714, %v787, 0.0
          %789 = vadd.xlane.f32.xlu0 %v788
          %v790 = vpop.xlane.xlu0 %789
          %v791 = vlog2.pop %v790
          %v792 = vmul.f32 %v791, 0.6931472
          %v793 = vsub.f32 %v785, %v792
          %v794 = vmul.f32 %v793, 1.442695
          %v795 = vpow.pop %v794
          %v796 = vsub.f32 %v793, %v780
          %v797 = vmul.f32 %v795, %v796
          %v798 = vsel %vm714, %v797, 0.0
          %799 = vadd.xlane.f32.xlu0 %v798
          %v800 = vpop.xlane.xlu0 %799
          %v801 = vmul.f32 %v800, %v733
          %vm802 = vcmask 7168
          %v803 = vsel %vm802, %v801, 0.0
          %804 = vadd.xlane.f32.xlu0 %v803
          %v805 = vpop.xlane.xlu0 %804
          %v806 = vrot.slane %v805, 4
          %v807 = vadd.f32 %v805, %v806
          %v808 = vrot.slane %v807, 2
          %v809 = vadd.f32 %v807, %v808
          %v810 = vrot.slane %v809, 1
          %v811 = vadd.f32 %v809, %v810
          %s812 = vtos %v811
          %s813 = smul.f32 %s812, 4.0
          %v814 = vrcp.pop 64.0
          %s815 = vtos %v814
          %s816 = smul.f32 %s813, %s815
          %s817 = sld [smem:[#allocation3]]
          %s818 = smul.f32 %s766, 0.5
          %s819 = smul.f32 %s816, 0.5
          %s820 = sadd.f32 %s818, %s819
          %s821 = sadd.f32 %s817, %s820
          %s822 = scalar_lea.smem [#allocation3], 0
          %823 = sst [smem:[%s822]] %s821
        $region56: #{tpu_custom_call.1} parent=43 // pred_fallthru
          _
        // Predicated region
        $region57: #{tpu_custom_call.1} parent=43 // pred_check
          %p824 = pneg %p196
        $region58: #{tpu_custom_call.1} parent=43 // pred_check_branch
          %826 = sbr.rel (%p824) target = $region60
        $region59: #{tpu_custom_call.1} parent=43 // pred_region
          %s828 = ssub.s32 16, 16
          %829 = vsyncadd [#allocation4], %s828
          %832 = dma.smem_to_hbm [#allocation3], 16, %s6, [#allocation4]
        $region60: #{tpu_custom_call.1} parent=43 // pred_fallthru
          _
        // Predicated region
        $region61: #{tpu_custom_call.1} parent=43 // pred_check
          %p833 = pneg %p196
        $region62: #{tpu_custom_call.1} parent=43 // pred_check_branch
          %835 = sbr.rel (%p833) target = $region64
        $region63: #{tpu_custom_call.1} parent=43 // pred_region
          %836 = dma.done [#allocation4], 16
        $region64: #{tpu_custom_call.1} parent=43 // pred_fallthru
          _
        %837 = sfence
      $region44: #{tpu_custom_call.1} parent=5 // pred_fallthru
        _
      %p838 = scmp.le.s32.totalorder 2, %s13
      // Predicated region
      $region65: #{tpu_custom_call.1} parent=5 // pred_check
        %p839 = pneg %p838
      $region66: #{tpu_custom_call.1} parent=5 // pred_check_branch
        %841 = sbr.rel (%p839) target = $region68
      $region67: #{tpu_custom_call.1} parent=5 // pred_region
        %s842 = ssub.s32 %s13, 2
      $region68: #{tpu_custom_call.1} parent=5 // pred_fallthru
        _
    $region6: #{tpu_custom_call.1} parent=1 // loop_footer
      %s17 = sadd.s32 1, %s13
    $region7: #{tpu_custom_call.1} parent=1 // loop_footer_branch
      %12 = sbr.rel target = $region3
    $region8: #{tpu_custom_call.1} parent=1 // loop_exit
      _
    %843 = vsyncpa [#allocation4], 1
    %s844 = scalar_lea.sflag [#allocation4], 1
    %845 = vsyncpa %s844, 1

</llo_original>
